<compile_context>
chip_gen: v7x
topology: tpu7x:2x2x1
jax: 0.10.0
libtpu: 0.0.40
codegen_flags: <defaults>
</compile_context>

<pallas_src>
import jax
import jax.numpy as jnp
from jax.experimental import pallas as pl
from jax.experimental.pallas import tpu as pltpu


def _where_kernel(x_ref, t1_ref, t2_ref, o_ref):
    # Single VPU select over one (padded) vreg; NaN in x selects t2, matching
    # torch.where(x < 0.0, ...).
    o_ref[...] = jnp.where(x_ref[...] < 0.0, t1_ref[...], t2_ref[...])


@jax.jit
def model_forward(x, tensor1, tensor2):
    # Dead-code block from the PyTorch module (cat + two views of `y`) is
    # intentionally omitted: it has no effect on the returned value.
    spec = pl.BlockSpec(memory_space=pltpu.MemorySpace.VMEM)  # whole array, no tiling
    n = x.size
    return pl.pallas_call(
        _where_kernel,
        out_shape=jax.ShapeDtypeStruct(x.shape, x.dtype),
        in_specs=[spec, spec, spec],
        out_specs=spec,
        cost_estimate=pl.CostEstimate(
            flops=n,
            transcendentals=0,
            bytes_accessed=4 * n * x.dtype.itemsize,  # 3 inputs + 1 output
        ),
    )(x, tensor1, tensor2)


if __name__ == "__main__":
    key = jax.random.PRNGKey(0)
    kx, k1, k2 = jax.random.split(key, 3)

    x = jax.random.normal(kx, (2, 3, 4), dtype=jnp.float32)
    # TODO(synk): tensor1/tensor2 are undefined globals in the original source;
    # deterministic stand-ins of the same shape are used here.
    tensor1 = jax.random.normal(k1, (2, 3, 4), dtype=jnp.float32)
    tensor2 = jax.random.normal(k2, (2, 3, 4), dtype=jnp.float32)

    out = jax.block_until_ready(model_forward(x, tensor1, tensor2))

    # Sanity check against pure-JAX reference (bitwise-identical select).
    ref = jnp.where(x < 0.0, tensor1, tensor2)
    assert out.shape == (2, 3, 4)
    assert jnp.array_equal(out, ref)

    print("KERNEL_OK")
</pallas_src>

<mosaic_0001>
module attributes {stable_mosaic.version = 11 : i64} {
  func.func @_where_kernel(%arg0: memref<2x3x4xf32, #tpu.memory_space<vmem>>, %arg1: memref<2x3x4xf32, #tpu.memory_space<vmem>>, %arg2: memref<2x3x4xf32, #tpu.memory_space<vmem>>, %arg3: memref<2x3x4xf32, #tpu.memory_space<vmem>>) attributes {dimension_semantics = [], scalar_prefetch = 0 : i64, scratch_operands = 0 : i64, tpu.core_type = #tpu.core_type<tc>} {
    %c0 = arith.constant 0 : index
    %c0_0 = arith.constant 0 : index
    %c0_1 = arith.constant 0 : index
    %0 = vector.load %arg0[%c0, %c0_0, %c0_1] : memref<2x3x4xf32, #tpu.memory_space<vmem>>, vector<2x3x4xf32>
    %cst = arith.constant 0.000000e+00 : f32
    %1 = vector.broadcast %cst : f32 to vector<2x3x4xf32>
    %2 = arith.cmpf olt, %0, %1 : vector<2x3x4xf32>
    %c0_2 = arith.constant 0 : index
    %c0_3 = arith.constant 0 : index
    %c0_4 = arith.constant 0 : index
    %3 = vector.load %arg1[%c0_2, %c0_3, %c0_4] : memref<2x3x4xf32, #tpu.memory_space<vmem>>, vector<2x3x4xf32>
    %c0_5 = arith.constant 0 : index
    %c0_6 = arith.constant 0 : index
    %c0_7 = arith.constant 0 : index
    %4 = vector.load %arg2[%c0_5, %c0_6, %c0_7] : memref<2x3x4xf32, #tpu.memory_space<vmem>>, vector<2x3x4xf32>
    %5 = arith.select %2, %3, %4 : vector<2x3x4xi1>, vector<2x3x4xf32>
    %c0_8 = arith.constant 0 : index
    %c0_9 = arith.constant 0 : index
    %c0_10 = arith.constant 0 : index
    %6 = vector.load %arg3[%c0_8, %c0_9, %c0_10] : memref<2x3x4xf32, #tpu.memory_space<vmem>>, vector<2x3x4xf32>
    tpu.vector_store %arg3[%c0_8, %c0_9, %c0_10], %5 {strides = array<i32>} : memref<2x3x4xf32, #tpu.memory_space<vmem>>, vector<2x3x4xf32>,
    return
  }
}

</mosaic_0001>

<llo_original>
// kernel: model_forward.1
$region0: #{model_forward.1}
  #allocation0 [shape = 'u32[]', space=smem, size = 0x4, offset = 0x4, fixed_abs, tag = 'smem constant byte address 0x4 - core index']
  #allocation1 [shape = 'u32[144,128]{1,0:T(1,128)}', space=vmem, size = 0x12000, scoped, tag = 'internal scratch']
  %s0 = inlined_call_operand.vmem [shape: f32[2,3,4], index: 0, kind: input, shape index: {}]
  %s1 = inlined_call_operand.vmem [shape: f32[2,3,4], index: 1, kind: input, shape index: {}]
  %s2 = inlined_call_operand.vmem [shape: f32[2,3,4], index: 2, kind: input, shape index: {}]
  %s3 = inlined_call_operand.vmem [shape: f32[2,3,4], index: 3, kind: output, shape index: {}]
  %s4 = sld [smem:[#allocation0]]
  $region22: #{model_forward.1} parent=0
    _
  %s6 = ssub.s32 1, %s4
  %s7 = scalar_select 0, %s6, %s4
  // Predicated region
  $region2: #{model_forward.1} parent=0 // pred_check
    _
  $region3: #{model_forward.1} parent=0 // pred_check_branch
    %9 = sbr.rel (0) target = $region5
  $region4: #{model_forward.1} parent=0 // pred_region
    _
  $region5: #{model_forward.1} parent=0 // pred_fallthru
    _
  // Predicated region
  $region6: #{model_forward.1} parent=0 // pred_check
    _
  $region7: #{model_forward.1} parent=0 // pred_check_branch
    %11 = sbr.rel (0) target = $region9
  $region8: #{model_forward.1} parent=0 // pred_region
    _
  $region9: #{model_forward.1} parent=0 // pred_fallthru
    _
  // Predicated region
  $region10: #{model_forward.1} parent=0 // pred_check
    _
  $region11: #{model_forward.1} parent=0 // pred_check_branch
    %13 = sbr.rel (0) target = $region13
  $region12: #{model_forward.1} parent=0 // pred_region
    _
  $region13: #{model_forward.1} parent=0 // pred_fallthru
    _
  %v14 = vld [vmem:[%s0] sm:$0x7]
  %v15 = vld [vmem:[%s0 + $0x4] sm:$0x7]
  %vm16 = vcmp.lt.f32.partialorder %v14, 0.0
  %vm17 = vcmp.lt.f32.partialorder %v15, 0.0
  %v18 = vld [vmem:[%s1] sm:$0x7]
  %v19 = vld [vmem:[%s1 + $0x4] sm:$0x7]
  %v20 = vld [vmem:[%s2] sm:$0x7]
  %v21 = vld [vmem:[%s2 + $0x4] sm:$0x7]
  %v22 = vsel %vm16, %v18, %v20
  %v23 = vsel %vm17, %v19, %v21
  %vm24 = vcmask 26624
  %25 = vst.msk [vmem:[%s3] sm:$0x7] %vm24, %v22
  %26 = vst.msk [vmem:[%s3 + $0x4] sm:$0x7] %vm24, %v23
  // Predicated region
  $region14: #{model_forward.1} parent=0 // pred_check
    _
  $region15: #{model_forward.1} parent=0 // pred_check_branch
    %28 = sbr.rel (0) target = $region17
  $region16: #{model_forward.1} parent=0 // pred_region
    _
  $region17: #{model_forward.1} parent=0 // pred_fallthru
    _
  // Predicated region
  $region18: #{model_forward.1} parent=0 // pred_check
    _
  $region19: #{model_forward.1} parent=0 // pred_check_branch
    %30 = sbr.rel (0) target = $region21
  $region20: #{model_forward.1} parent=0 // pred_region
    _
  $region21: #{model_forward.1} parent=0 // pred_fallthru
    _

</llo_original>
